<compile_context>
chip_gen: v7x
topology: tpu7x:2x2x1
jax: 0.10.0
libtpu: 0.0.40
codegen_flags: <defaults>
</compile_context>

<pallas_src>
import jax
import jax.numpy as jnp
from jax import lax
from jax.experimental import pallas as pl
from jax.experimental.pallas import tpu as pltpu


def _loss_kernel(scores_ref, targets_ref, feats_ref, margin_ref, out_ref):
    # ---------------- BCEWithLogitsLoss (mean reduction) ----------------
    x = scores_ref[...].astype(jnp.float32)
    y = targets_ref[...].astype(jnp.float32)
    # numerically stable formulation used by PyTorch:
    #   max(x, 0) - x*y + log(1 + exp(-|x|))
    bce = jnp.maximum(x, 0.0) - x * y + jnp.log1p(jnp.exp(-jnp.abs(x)))
    out_ref[0, 0] = jnp.mean(bce)

    # ---------------- TripletLoss ----------------
    margin = margin_ref[0]
    feats = feats_ref[...].astype(jnp.float32)
    bs = feats.shape[0]
    half = bs // 2
    n_feats = feats[:half, :]                       # (half, D) anchors

    # sum-of-squares computed ONCE on the full feats, reused for both
    # broadcast terms (no transposed column materialization).
    sq = jnp.sum(feats * feats, axis=1)             # (bs,)
    sq_n = sq[:half][:, None]                       # (half, 1) column term
    sq_all = sq[None, :]                            # (1, bs)   row term

    # single fused MXU contraction: n_feats @ feats^T without an explicit .T
    dots = lax.dot_general(
        n_feats, feats,
        dimension_numbers=(((1,), (1,)), ((), ())),
        preferred_element_type=jnp.float32)         # (half, bs)

    d2 = sq_n + sq_all - 2.0 * dots
    d = jnp.sqrt(jnp.maximum(d2, 0.0))              # (half, bs) distances

    n_d = d[:, :half]                               # cdist(n_feats, n_feats)
    a_d = d[:, half:]                               # cdist(n_feats, a_feats)

    n_d_max = jnp.max(n_d, axis=0)                  # torch.max(n_d, dim=0)
    a_d_min = jnp.min(a_d, axis=0)                  # torch.min(a_d, dim=0)
    hinge = jnp.maximum(0.0, margin - a_d_min)      # relu(margin - min)

    out_ref[0, 1] = jnp.mean(n_d_max) + jnp.mean(hinge)


def loss_forward(scores, feats, targets, alpha=0.01, margin=100.0):
    """Pallas equivalent of Loss.forward -> (loss_ce, alpha * loss_triplet)."""
    margin_arr = jnp.asarray([margin], dtype=jnp.float32)
    out = pl.pallas_call(
        _loss_kernel,
        out_shape=jax.ShapeDtypeStruct((1, 2), jnp.float32),
        in_specs=[
            pl.BlockSpec(memory_space=pltpu.MemorySpace.VMEM),   # scores
            pl.BlockSpec(memory_space=pltpu.MemorySpace.VMEM),   # targets
            pl.BlockSpec(memory_space=pltpu.MemorySpace.VMEM),   # feats
            pl.BlockSpec(memory_space=pltpu.MemorySpace.SMEM),   # margin scalar
        ],
        out_specs=pl.BlockSpec(memory_space=pltpu.MemorySpace.SMEM),
    )(scores, targets, feats, margin_arr)
    # alpha scaling and scalar extraction stay outside the kernel.
    return out[0, 0], alpha * out[0, 1]
    # TODO(synk): at production sizes (C/D in the thousands, B >= 1024) this
    # single-block design must be replaced with a gridded, K-tiled version
    # (v7x has only 64 MiB VMEM); current shapes make that unnecessary.


if __name__ == "__main__":
    key = jax.random.PRNGKey(0)
    k1, k2, k3 = jax.random.split(key, 3)

    # small shapes consistent with the module's forward
    N, C = 2, 4        # scores / targets : (batch, classes)
    B, D = 8, 32       # feats            : (batch, hidden)   (B even)

    scores = jax.random.normal(k1, (N, C), dtype=jnp.float32)
    targets = (jax.random.uniform(k2, (N, C)) > 0.5).astype(jnp.float32)
    feats = jax.random.normal(k3, (B, D), dtype=jnp.float32)

    loss_ce, loss_triplet = loss_forward(scores, feats, targets, alpha=0.01)
    jax.block_until_ready((loss_ce, loss_triplet))
    print("KERNEL_OK")
</pallas_src>

<mosaic_0001>
module attributes {stable_mosaic.version = 11 : i64} {
  func.func @_loss_kernel(%arg0: memref<2x4xf32, #tpu.memory_space<vmem>>, %arg1: memref<2x4xf32, #tpu.memory_space<vmem>>, %arg2: memref<8x32xf32, #tpu.memory_space<vmem>>, %arg3: memref<1xf32, #tpu.memory_space<smem>>, %arg4: memref<1x2xf32, #tpu.memory_space<smem>>) attributes {dimension_semantics = [], scalar_prefetch = 0 : i64, scratch_operands = 0 : i64, tpu.core_type = #tpu.core_type<tc>} {
    %c0 = arith.constant 0 : index
    %c0_0 = arith.constant 0 : index
    %0 = vector.load %arg0[%c0, %c0_0] : memref<2x4xf32, #tpu.memory_space<vmem>>, vector<2x4xf32>
    %c0_1 = arith.constant 0 : index
    %c0_2 = arith.constant 0 : index
    %1 = vector.load %arg1[%c0_1, %c0_2] : memref<2x4xf32, #tpu.memory_space<vmem>>, vector<2x4xf32>
    %cst = arith.constant 0.000000e+00 : f32
    %2 = vector.broadcast %cst : f32 to vector<2x4xf32>
    %3 = arith.maximumf %0, %2 : vector<2x4xf32>
    %4 = arith.mulf %0, %1 : vector<2x4xf32>
    %5 = arith.subf %3, %4 : vector<2x4xf32>
    %6 = math.absf %0 : vector<2x4xf32>
    %cst_3 = arith.constant 0.000000e+00 : f32
    %7 = vector.broadcast %cst_3 : f32 to vector<2x4xf32>
    %8 = arith.subf %7, %6 : vector<2x4xf32>
    %9 = math.exp %8 : vector<2x4xf32>
    %10 = math.log1p %9 : vector<2x4xf32>
    %11 = arith.addf %5, %10 : vector<2x4xf32>
    %12 = vector.shape_cast %11 : vector<2x4xf32> to vector<1x2x4xf32>
    %cst_4 = arith.constant dense<0.000000e+00> : vector<1xf32>
    %13 = vector.multi_reduction <add>, %12, %cst_4 [1, 2] : vector<1x2x4xf32> to vector<1xf32>
    %14 = vector.shape_cast %13 : vector<1xf32> to vector<1x1x1xf32>
    %15 = vector.extract %14[0, 0, 0] : f32 from vector<1x1x1xf32>
    %cst_5 = arith.constant 8.000000e+00 : f32
    %16 = arith.divf %15, %cst_5 : f32
    %c0_6 = arith.constant 0 : index
    %c0_7 = arith.constant 0 : index
    %17 = memref.load %arg4[%c0_6, %c0_7] : memref<1x2xf32, #tpu.memory_space<smem>>
    memref.store %16, %arg4[%c0_6, %c0_7] : memref<1x2xf32, #tpu.memory_space<smem>>
    %c0_8 = arith.constant 0 : index
    %18 = memref.load %arg3[%c0_8] : memref<1xf32, #tpu.memory_space<smem>>
    %c0_9 = arith.constant 0 : index
    %c0_10 = arith.constant 0 : index
    %19 = vector.load %arg2[%c0_9, %c0_10] : memref<8x32xf32, #tpu.memory_space<vmem>>, vector<8x32xf32>
    %20 = vector.extract_strided_slice %19 {offsets = [0, 0], sizes = [4, 32], strides = [1, 1]} : vector<8x32xf32> to vector<4x32xf32>
    %21 = arith.mulf %19, %19 : vector<8x32xf32>
    %cst_11 = arith.constant dense<0.000000e+00> : vector<8xf32>
    %22 = vector.multi_reduction <add>, %21, %cst_11 [1] : vector<8x32xf32> to vector<8xf32>
    %23 = vector.extract_strided_slice %22 {offsets = [0], sizes = [4], strides = [1]} : vector<8xf32> to vector<4xf32>
    %24 = vector.shape_cast %23 : vector<4xf32> to vector<4x1xf32>
    %25 = vector.shape_cast %22 : vector<8xf32> to vector<1x8xf32>
    %cst_12 = arith.constant dense<0.000000e+00> : vector<4x8xf32>
    %26 = tpu.matmul %20, %19, %cst_12 {dimension_numbers = #tpu.dot_dimension_numbers<[1], [1], [0], [0], [0, 0, 1, 0], [], []>} : vector<4x32xf32>, vector<8x32xf32>, vector<4x8xf32> -> vector<4x8xf32>
    %27 = vector.broadcast %24 : vector<4x1xf32> to vector<4x8xf32>
    %28 = vector.broadcast %25 : vector<1x8xf32> to vector<4x8xf32>
    %29 = arith.addf %27, %28 : vector<4x8xf32>
    %cst_13 = arith.constant 2.000000e+00 : f32
    %30 = vector.broadcast %cst_13 : f32 to vector<4x8xf32>
    %31 = arith.mulf %30, %26 : vector<4x8xf32>
    %32 = arith.subf %29, %31 : vector<4x8xf32>
    %cst_14 = arith.constant 0.000000e+00 : f32
    %33 = vector.broadcast %cst_14 : f32 to vector<4x8xf32>
    %34 = arith.maximumf %32, %33 : vector<4x8xf32>
    %35 = math.sqrt %34 : vector<4x8xf32>
    %36 = vector.extract_strided_slice %35 {offsets = [0, 0], sizes = [4, 4], strides = [1, 1]} : vector<4x8xf32> to vector<4x4xf32>
    %37 = vector.extract_strided_slice %35 {offsets = [0, 4], sizes = [4, 4], strides = [1, 1]} : vector<4x8xf32> to vector<4x4xf32>
    %cst_15 = arith.constant dense<0xFF800000> : vector<4xf32>
    %38 = vector.multi_reduction <maximumf>, %36, %cst_15 [0] : vector<4x4xf32> to vector<4xf32>
    %cst_16 = arith.constant dense<0x7F800000> : vector<4xf32>
    %39 = vector.multi_reduction <minimumf>, %37, %cst_16 [0] : vector<4x4xf32> to vector<4xf32>
    %40 = vector.broadcast %18 : f32 to vector<4xf32>
    %41 = arith.subf %40, %39 : vector<4xf32>
    %cst_17 = arith.constant 0.000000e+00 : f32
    %42 = vector.broadcast %cst_17 : f32 to vector<4xf32>
    %43 = arith.maximumf %42, %41 : vector<4xf32>
    %44 = vector.shape_cast %38 : vector<4xf32> to vector<1x4xf32>
    %cst_18 = arith.constant dense<0.000000e+00> : vector<1xf32>
    %45 = vector.multi_reduction <add>, %44, %cst_18 [1] : vector<1x4xf32> to vector<1xf32>
    %46 = vector.shape_cast %45 : vector<1xf32> to vector<1x1xf32>
    %47 = vector.extract %46[0, 0] : f32 from vector<1x1xf32>
    %cst_19 = arith.constant 4.000000e+00 : f32
    %48 = arith.divf %47, %cst_19 : f32
    %49 = vector.shape_cast %43 : vector<4xf32> to vector<1x4xf32>
    %cst_20 = arith.constant dense<0.000000e+00> : vector<1xf32>
    %50 = vector.multi_reduction <add>, %49, %cst_20 [1] : vector<1x4xf32> to vector<1xf32>
    %51 = vector.shape_cast %50 : vector<1xf32> to vector<1x1xf32>
    %52 = vector.extract %51[0, 0] : f32 from vector<1x1xf32>
    %cst_21 = arith.constant 4.000000e+00 : f32
    %53 = arith.divf %52, %cst_21 : f32
    %54 = arith.addf %48, %53 : f32
    %c0_22 = arith.constant 0 : index
    %c1 = arith.constant 1 : index
    %55 = memref.load %arg4[%c0_22, %c1] : memref<1x2xf32, #tpu.memory_space<smem>>
    memref.store %54, %arg4[%c0_22, %c1] : memref<1x2xf32, #tpu.memory_space<smem>>
    return
  }
}

</mosaic_0001>

<llo_original>
// kernel: tpu_custom_call.1
$region0: #{tpu_custom_call.1}
  #allocation0 [shape = 'u32[]', space=smem, size = 0x4, offset = 0x4, fixed_abs, tag = 'smem constant byte address 0x4 - core index']
  #allocation1 [shape = 'u32[144,128]{1,0:T(1,128)}', space=vmem, size = 0x12000, scoped, tag = 'internal scratch']
  #allocation2 [shape = 'f32[1]{0:T(128)S(6)}', space=smem, size = 0x200, scoped, tag = 'scoped memory for tpu_custom_call.1']
  %s0 = inlined_call_operand.vmem [shape: f32[2,4], index: 0, kind: input, shape index: {}]
  %s1 = inlined_call_operand.hbm [shape: f32[2,4], index: 1, kind: input, shape index: {}]
  %s2 = inlined_call_operand.vmem [shape: f32[8,32], index: 2, kind: input, shape index: {}]
  %s3 = inlined_call_operand.<no memory space> [shape: f32[1], index: 3, kind: input, shape index: {}]
  %s4 = inlined_call_operand.hbm [shape: f32[1,2], index: 4, kind: output, shape index: {}]
  %s5 = sld [smem:[#allocation0]]
  $region30: #{tpu_custom_call.1} parent=0
    _
  %s7 = ssub.s32 1, %s5
  %s8 = scalar_select 0, %s7, %s5
  %9 = sst [smem:[#allocation2]] %s3
  $region1: #{tpu_custom_call.1} parent=0
    #allocation3 [shape = 'u8[1024]{0}', space=vmem, size = 0x400, scoped, tag = 'input window, operand 1, single buffered']
    #allocation4 [shape = 's32[1]{0}', space=sflag, size = 0x4, scoped, tag = 'scoped memory for tpu_custom_call.1']
    #allocation5 [shape = 's32[1]{0}', space=sflag, size = 0x4, scoped, tag = 'scoped memory for tpu_custom_call.1']
    #allocation6 [shape = 'u8[512]{0}', space=smem, size = 0x200, scoped, tag = 'output window, operand 0, single buffered']
    %10 = vsyncpa [#allocation4], 0
    %11 = vsyncpa [#allocation5], 0
    // Predicated region
    $region2: #{tpu_custom_call.1} parent=1 // pred_check
      _
    $region3: #{tpu_custom_call.1} parent=1 // pred_check_branch
      %13 = sbr.rel (0) target = $region5
    $region4: #{tpu_custom_call.1} parent=1 // pred_region
      _
    $region5: #{tpu_custom_call.1} parent=1 // pred_fallthru
      _
    // Predicated region
    $region6: #{tpu_custom_call.1} parent=1 // pred_check
      _
    $region7: #{tpu_custom_call.1} parent=1 // pred_check_branch
      %15 = sbr.rel (0) target = $region9
    $region8: #{tpu_custom_call.1} parent=1 // pred_region
      %s17 = ssub.s32 32, 32
      %18 = vsyncadd [#allocation4], %s17
      %s20 = sshll.u32 [#allocation3], 4
      %s21 = int_to_ptr.vmem [resolvable:$true] %s20
      %23 = dma.hbm_to_vmem [thread:$0]  %s1, 32, %s21, [#allocation4]
    $region9: #{tpu_custom_call.1} parent=1 // pred_fallthru
      _
    // Predicated region
    $region10: #{tpu_custom_call.1} parent=1 // pred_check
      _
    $region11: #{tpu_custom_call.1} parent=1 // pred_check_branch
      %25 = sbr.rel (0) target = $region13
    $region12: #{tpu_custom_call.1} parent=1 // pred_region
      _
    $region13: #{tpu_custom_call.1} parent=1 // pred_fallthru
      _
    // Predicated region
    $region14: #{tpu_custom_call.1} parent=1 // pred_check
      _
    $region15: #{tpu_custom_call.1} parent=1 // pred_check_branch
      %27 = sbr.rel (0) target = $region17
    $region16: #{tpu_custom_call.1} parent=1 // pred_region
      _
    $region17: #{tpu_custom_call.1} parent=1 // pred_fallthru
      _
    // Predicated region
    $region18: #{tpu_custom_call.1} parent=1 // pred_check
      _
    $region19: #{tpu_custom_call.1} parent=1 // pred_check_branch
      %29 = sbr.rel (0) target = $region21
    $region20: #{tpu_custom_call.1} parent=1 // pred_region
      %30 = dma.done [#allocation4], 32
    $region21: #{tpu_custom_call.1} parent=1 // pred_fallthru
      _
    %v31 = vld [vmem:[%s0] sm:$0x3]
    %v32 = vld [vmem:[#allocation3] sm:$0x3]
    %v33 = vmax.f32 %v31, 0.0
    %v34 = vmul.f32 %v31, %v32
    %v35 = vsub.f32 %v33, %v34
    %v36 = vand.u32 2147483647, %v31
    %v37 = vsub.f32 0.0, %v36
    %v38 = vmul.f32 %v37, 1.442695
    %v39 = vpow.pop %v38
    %v40 = vadd.f32 %v39, 1.0
    %v41 = vlog2.pop %v40
    %v42 = vmul.f32 %v41, 0.6931472
    %v43 = vmul.f32 -0.5, %v39
    %v44 = vadd.f32 %v43, 1.0
    %v45 = vmul.f32 %v44, %v39
    %v46 = vand.u32 2147483647, %v39
    %vm47 = vcmp.lt.f32.partialorder %v46, 0.0004427343
    %v48 = vsel %vm47, %v45, %v42
    %v49 = vadd.f32 %v35, %v48
    %vm50 = vcmask 25600
    %v51 = vsel %vm50, %v49, 0.0
    %52 = vadd.xlane.f32.xlu0 %v51
    %v53 = vpop.xlane.xlu0 %52
    %v54 = vrot.slane %v53, 4
    %v55 = vadd.f32 %v53, %v54
    %v56 = vrot.slane %v55, 2
    %v57 = vadd.f32 %v55, %v56
    %v58 = vrot.slane %v57, 1
    %v59 = vadd.f32 %v57, %v58
    %s60 = vtos %v59
    %v61 = vrcp.pop 8.0
    %s62 = vtos %v61
    %s63 = smul.f32 %s60, %s62
    %s64 = scalar_lea.smem [#allocation6], 0
    %65 = sst [smem:[%s64]] %s63
    %s66 = sld [smem:[#allocation2]]
    %v67 = vld [vmem:[%s2] sm:$0xff]
    %v68 = vmul.f32 %v67, %v67
    %vm69 = vcmask 261120
    %v70 = vsel %vm69, %v68, 0.0
    %71 = vadd.xlane.f32.xlu0 %v70
    %v72 = vpop.xlane.xlu0 %71
    %v74 = vsel %vm69, %v67, 0
    %76 = vmatprep.subr.mxu0 0.0
    %77 = vmatpush1.xpose.msra.mxu0 %v74
    %78 = vmatprep.subr.mxu0 0.0
    %79 = vmatpush1.xpose.msra.mxu0 0.0
    %80 = vmatprep.subr.mxu0 0.0
    %81 = vmatpush1.xpose.msra.mxu0 0.0
    %82 = vmatprep.subr.mxu0 0.0
    %83 = vmatpush1.xpose.msra.mxu0 0.0
    %84 = vmatprep.subr.mxu0 0.0
    %85 = vmatpush1.xpose.msra.mxu0 0.0
    %86 = vmatprep.subr.mxu0 0.0
    %87 = vmatpush1.xpose.msra.mxu0 0.0
    %88 = vmatprep.subr.mxu0 0.0
    %89 = vmatpush1.xpose.msra.mxu0 0.0
    %90 = vmatprep.subr.mxu0 0.0
    %91 = vmatpush1.xpose.msra.mxu0 0.0
    %92 = vmatprep.subr.mxu0 0.0
    %93 = vmatpush1.xpose.msra.mxu0 0.0
    %94 = vmatprep.subr.mxu0 0.0
    %95 = vmatpush1.xpose.msra.mxu0 0.0
    %96 = vmatprep.subr.mxu0 0.0
    %97 = vmatpush1.xpose.msra.mxu0 0.0
    %98 = vmatprep.subr.mxu0 0.0
    %99 = vmatpush1.xpose.msra.mxu0 0.0
    %100 = vmatprep.subr.mxu0 0.0
    %101 = vmatpush1.xpose.msra.mxu0 0.0
    %102 = vmatprep.subr.mxu0 0.0
    %103 = vmatpush1.xpose.msra.mxu0 0.0
    %104 = vmatprep.subr.mxu0 0.0
    %105 = vmatpush1.xpose.msra.mxu0 0.0
    %106 = vmatprep.subr.mxu0 0.0
    %107 = vmatpush1.xpose.msra.mxu0 0.0
    %108 = vmatprep.subr.mxu0 0.0
    %109 = vmatpush1.xpose.msra.mxu0 0.0
    %110 = vmatprep.subr.mxu0 0.0
    %111 = vmatpush1.xpose.msra.mxu0 0.0
    %112 = vmatprep.subr.mxu0 0.0
    %113 = vmatpush1.xpose.msra.mxu0 0.0
    %114 = vmatprep.subr.mxu0 0.0
    %115 = vmatpush1.xpose.msra.mxu0 0.0
    %116 = vmatprep.subr.mxu0 0.0
    %117 = vmatpush1.xpose.msra.mxu0 0.0
    %118 = vmatprep.subr.mxu0 0.0
    %119 = vmatpush1.xpose.msra.mxu0 0.0
    %120 = vmatprep.subr.mxu0 0.0
    %121 = vmatpush1.xpose.msra.mxu0 0.0
    %122 = vmatprep.subr.mxu0 0.0
    %123 = vmatpush1.xpose.msra.mxu0 0.0
    %124 = vmatprep.subr.mxu0 0.0
    %125 = vmatpush1.xpose.msra.mxu0 0.0
    %126 = vmatprep.subr.mxu0 0.0
    %127 = vmatpush1.xpose.msra.mxu0 0.0
    %128 = vmatprep.subr.mxu0 0.0
    %129 = vmatpush1.xpose.msra.mxu0 0.0
    %130 = vmatprep.subr.mxu0 0.0
    %131 = vmatpush1.xpose.msra.mxu0 0.0
    %132 = vmatprep.subr.mxu0 0.0
    %133 = vmatpush1.xpose.msra.mxu0 0.0
    %134 = vmatprep.subr.mxu0 0.0
    %135 = vmatpush1.xpose.msra.mxu0 0.0
    %136 = vmatprep.subr.mxu0 0.0
    %137 = vmatpush1.xpose.msra.mxu0 0.0
    %138 = vmatprep.subr.mxu0 0.0
    %139 = vmatpush1.xpose.msra.mxu0 0.0
    %140 = vmatprep.mubr.f32.mxu0 0.0
    %141 = vmatmul.mubr.f32.gmra.mrb[0].mxu0 %v74
    %v142 = vpop.f32.mrb[0].mxu0
    %v143 = vadd.f32 0.0, %v142
    %v144 = vpop.f32.mrb[0].mxu0
    %145 = vdwg.mxu0
    %v147 = vlaneseq
    %v148 = vand.u32 %v147, 127
    %v149 = vlaneseq
    %v150 = vshrl.u32 %v149, 7
    %v151 = vsub.s32 %v148, %v150
    %v152 = vrot.slane %v72, %v151
    %vm153 = vcmask 1042434
    %v154 = vsel %vm153, %v152, %v152
    %vm155 = vcmask 1043459
    %v156 = vsel %vm155, %v152, %v154
    %v158 = vadd.f32 %v72, %v156
    %v159 = vmul.f32 %v143, 2.0
    %v160 = vsub.f32 %v158, %v159
    %v161 = vmax.f32 %v160, 0.0
    %v162 = vrsqrt.pop %v161
    %v163 = vmul.f32 %v161, %v162
    %vm164 = vcmp.eq.f32.partialorder %v161, inf
    %v165 = vsel %vm164, %v161, %v163
    %vm166 = vcmp.eq.f32.partialorder %v161, 0.0
    %v167 = vand.u32 %v161, 2147483648
    %v168 = vsel %vm166, %v167, %v165
    %vm169 = vcmask 27648
    %v170 = vsel %vm169, %v168, -inf
    %v171 = vrot.slane %v170, 4
    %v172 = vmax.f32 %v170, %v171
    %v173 = vrot.slane %v172, 2
    %v174 = vmax.f32 %v172, %v173
    %v175 = vrot.slane %v174, 1
    %v176 = vmax.f32 %v174, %v175
    %vm177 = vcmask 60448
    %v178 = vsel %vm177, %v168, inf
    %v179 = vrot.slane %v178, 4
    %v180 = vmin.f32 %v178, %v179
    %v181 = vrot.slane %v180, 2
    %v182 = vmin.f32 %v180, %v181
    %v183 = vrot.slane %v182, 1
    %v184 = vmin.f32 %v182, %v183
    %v185 = vstv %s66
    %v186 = vsub.f32 %v185, %v184
    %v187 = vmax.f32 %v186, 0.0
    %vm188 = vcmask 31744
    %v189 = vsel %vm188, %v176, 0.0
    %190 = vadd.xlane.f32.xlu0 %v189
    %v191 = vpop.xlane.xlu0 %190
    %s192 = vtos %v191
    %v193 = vrcp.pop 4.0
    %s194 = vtos %v193
    %s195 = smul.f32 %s192, %s194
    %197 = vrot.lane.b32.xlu0 %v187, 124
    %v198 = vpop.permute.xlu0 %197
    %v200 = vsel %vm188, %v198, 0.0
    %201 = vadd.xlane.f32.xlu0 %v200
    %v202 = vpop.xlane.xlu0 %201
    %s203 = vtos %v202
    %v204 = vrcp.pop 4.0
    %s205 = vtos %v204
    %s206 = smul.f32 %s203, %s205
    %s207 = sadd.f32 %s195, %s206
    %s208 = scalar_lea.smem [#allocation6], 1
    %209 = sst [smem:[%s208]] %s207
    // Predicated region
    $region22: #{tpu_custom_call.1} parent=1 // pred_check
      _
    $region23: #{tpu_custom_call.1} parent=1 // pred_check_branch
      %211 = sbr.rel (0) target = $region25
    $region24: #{tpu_custom_call.1} parent=1 // pred_region
      %s213 = ssub.s32 16, 16
      %214 = vsyncadd [#allocation5], %s213
      %217 = dma.smem_to_hbm [#allocation6], 16, %s4, [#allocation5]
    $region25: #{tpu_custom_call.1} parent=1 // pred_fallthru
      _
    // Predicated region
    $region26: #{tpu_custom_call.1} parent=1 // pred_check
      _
    $region27: #{tpu_custom_call.1} parent=1 // pred_check_branch
      %219 = sbr.rel (0) target = $region29
    $region28: #{tpu_custom_call.1} parent=1 // pred_region
      %220 = dma.done [#allocation5], 16
    $region29: #{tpu_custom_call.1} parent=1 // pred_fallthru
      _
    %221 = sfence
    %222 = vsyncpa [#allocation4], 1
    %223 = vsyncpa [#allocation5], 1

</llo_original>
